<compile_context>
chip_gen: v7x
topology: tpu7x:2x2x1
jax: 0.10.0
libtpu: 0.0.40
codegen_flags: <defaults>
</compile_context>

<pallas_src>
import math

import jax
import jax.numpy as jnp
from jax.experimental import pallas as pl
from jax.experimental.pallas import tpu as pltpu


# ---------------------------------------------------------------------------
# VMEM / tiling helpers
# ---------------------------------------------------------------------------

def _vmem_limit_bytes():
    """Generation-aware scoped-VMEM limit: ~48 MiB on 64-MiB parts (v7x),
    up to 112 MiB on 128-MiB parts (v5e/v6e)."""
    cap = 64 << 20
    try:
        info = pltpu.get_tpu_info()
        cap = int(getattr(info, "vmem_capacity_bytes", cap) or cap)
    except Exception:
        pass
    return int(min(max(cap - (16 << 20), 32 << 20), 112 << 20))


def _choose_row_tile(n_rows, bytes_per_row, budget_bytes, *, max_tile=1024):
    """Largest multiple-of-8 row tile that (a) divides n_rows (so no jnp.pad /
    extra HBM pass over the image is ever needed), (b) fits the VMEM budget,
    (c) leaves >= 2 grid steps so v7x's two TensorCores both get work."""
    cap = min(max_tile, budget_bytes // max(1, bytes_per_row))
    cap = max(8, (cap // 8) * 8)
    cap = min(cap, n_rows)
    divisors = [t for t in range(8, cap + 1, 8) if n_rows % t == 0]
    if divisors:
        multi = [t for t in divisors if t <= n_rows // 2]   # >= 2 grid steps if possible
        return multi[-1] if multi else divisors[-1]
    # No multiple-of-8 divisor: fall back to one full-array block (block dims
    # equal to the full array dims bypass the (8,128) constraint).
    # TODO(synk): add in-kernel tail masking for huge, indivisible row counts.
    return n_rows


# ---------------------------------------------------------------------------
# Pallas kernel: encoder -> rsample -> decoder -> per-sample SSE (fused)
# ---------------------------------------------------------------------------

def fused_enc_dec_kernel(img_ref, eps_ref, w_enc_ref, b_enc_ref, w_dec_ref, b_dec_ref,
                         out_ref):
    """Encoder ([loc|log_scale] fused matmul) -> rsample -> decoder -> per-sample SSE.

    The f32 image tile is streamed from HBM exactly once and cast to bf16 in
    VMEM for the MXU; the reconstruction / diff never leave VMEM.  Results are
    packed into one (tn, 3*Dx+1) buffer: [loc | log_scale | x_q | sse].
    """
    dim_x = w_enc_ref.shape[-1] // 2
    img_f32 = img_ref[...]                                     # (tn, P) f32 - single HBM read
    img_bf16 = img_f32.astype(jnp.bfloat16)                    # cast in VMEM, no extra HBM pass

    # One MXU pass producing [loc | log_scale] (2*Dx output columns).
    h = jnp.dot(img_bf16, w_enc_ref[...],
                preferred_element_type=jnp.float32) + b_enc_ref[...]
    loc = h[:, :dim_x]
    log_scale = h[:, dim_x:]
    x_q = loc + jnp.exp(log_scale) * eps_ref[...]              # reparameterized sample

    # Decoder + Gaussian reconstruction term; rec/diff stay local.
    rec = jnp.dot(x_q.astype(w_dec_ref.dtype), w_dec_ref[...],
                  preferred_element_type=jnp.float32) + b_dec_ref[...]
    diff = rec - img_f32
    sq = jnp.sum(diff * diff, axis=-1, keepdims=True)          # (tn, 1) per-sample SSE

    out_ref[...] = jnp.concatenate([h, x_q, sq], axis=-1)      # single packed store


# ---------------------------------------------------------------------------
# Pallas wrapper
# ---------------------------------------------------------------------------

def encode_decode_pallas(img_flat, eps, params, *, row_tile=None):
    """img_flat: (N, P) float32 images, eps: (N, Dx) float32 noise.

    Returns (loc, log_scale, x_q, sq) with shapes (N, Dx) x3 and (N,)."""
    N, P = img_flat.shape
    Dx = params['w_loc'].shape[1]
    f32 = jnp.float32
    bf16 = jnp.bfloat16
    out_w = 3 * Dx + 1

    # Fuse the two encoder projections into one (P, 2*Dx) bf16 weight (f32 accumulate).
    w_enc = jnp.concatenate([params['w_loc'], params['w_scale']], axis=1).astype(bf16)
    b_enc = jnp.concatenate([params['b_loc'], params['b_scale']], axis=1).astype(f32)
    w_dec = params['w_dec'].astype(bf16)
    b_dec = params['b_dec'].astype(f32)

    vmem_limit = _vmem_limit_bytes()
    # Double-buffered pinned weights/biases.
    weight_bytes = 2 * (P * 2 * Dx * 2 + 2 * Dx * 4 + Dx * P * 2 + P * 4)
    # Per-row VMEM footprint: double-buffered streamed img/eps/out tiles plus
    # the in-kernel bf16 image copy and f32 rec/diff intermediates.
    bytes_per_row = (2 * (4 * P + 4 * Dx + 4 * out_w)   # pipelined I/O (2 buffers)
                     + 2 * P + 4 * P + 4 * P            # img_bf16, rec, diff
                     + 16 * Dx)                         # h / x_q f32 temporaries
    budget = max(1 << 20, (vmem_limit * 3) // 5 - weight_bytes)

    tn = row_tile if row_tile is not None else _choose_row_tile(N, bytes_per_row, budget)
    assert N % tn == 0, f"row tile {tn} must divide N={N}"

    cost = pl.CostEstimate(
        flops=int(2 * N * P * (2 * Dx) + 2 * N * Dx * P + 5 * N * P),
        transcendentals=int(N * Dx),
        bytes_accessed=int(N * P * 4 + N * Dx * 4 + N * out_w * 4
                           + (P * 2 * Dx + Dx * P) * 2 + (2 * Dx + P) * 4),
    )

    packed = pl.pallas_call(
        fused_enc_dec_kernel,
        grid=(N // tn,),
        in_specs=[pl.BlockSpec((tn, P), lambda i: (i, 0)),        # f32 image tile (streamed once)
                  pl.BlockSpec((tn, Dx), lambda i: (i, 0)),       # eps tile
                  pl.BlockSpec((P, 2 * Dx), lambda i: (0, 0)),    # fused encoder weight (pinned)
                  pl.BlockSpec((1, 2 * Dx), lambda i: (0, 0)),
                  pl.BlockSpec((Dx, P), lambda i: (0, 0)),        # decoder weight (pinned)
                  pl.BlockSpec((1, P), lambda i: (0, 0))],
        out_specs=pl.BlockSpec((tn, out_w), lambda i: (i, 0)),    # single packed output
        out_shape=jax.ShapeDtypeStruct((N, out_w), f32),
        compiler_params=pltpu.CompilerParams(
            dimension_semantics=("parallel",),
            vmem_limit_bytes=vmem_limit),
        cost_estimate=cost,
    )(img_flat, eps, w_enc, b_enc, w_dec, b_dec)

    loc = packed[:, :Dx]
    log_scale = packed[:, Dx:2 * Dx]
    x_q = packed[:, 2 * Dx:3 * Dx]
    sq = packed[:, 3 * Dx]
    return loc, log_scale, x_q, sq


# ---------------------------------------------------------------------------
# LinearDynamical.forward equivalent (single camera "camera0")
# ---------------------------------------------------------------------------

def linear_dynamical_forward(params, batchdata, eps, *, beta=1.0, sigma=1.0,
                             row_tile=None):
    action = batchdata['action']                       # (T, B, Du)
    imgs = batchdata['camera']['camera0']              # (T, B, C, H, W)
    T, B, Du = action.shape
    _, _, C, H, W = imgs.shape
    P = C * H * W
    N = T * B
    Dx = params['A'].shape[0]

    # f32 image streamed straight into the kernel (bf16 cast happens in VMEM),
    # so the dominant (N, P) tensor crosses HBM exactly once.
    img_flat = imgs.reshape(N, P).astype(jnp.float32)
    eps_flat = eps.reshape(N, Dx).astype(jnp.float32)

    loc, log_scale, x_q, sq = encode_decode_pallas(img_flat, eps_flat, params,
                                                   row_tile=row_tile)

    x_q_T = x_q.reshape(T, B, Dx)
    loc_T = loc.reshape(T, B, Dx)
    logs_T = log_scale.reshape(T, B, Dx)
    sq_T = sq.reshape(T, B)

    # Linear transition prior + analytic Gaussian KL for t = 1..T-1.  This is
    # only (T-1)*B rows of Dx-wide work, so plain jnp (XLA-fused) beats a
    # dedicated pallas_call whose grid-step/launch overhead dominates.
    x_prev = x_q_T[:-1]                                          # (T-1, B, Dx)
    u_prev = action[:-1].astype(jnp.float32)
    A = params['A'].astype(jnp.float32)
    Bm = params['B'].astype(jnp.float32)
    prior = (jnp.einsum('tbi,ij->tbj', x_prev, A)
             + jnp.einsum('tbi,ij->tbj', u_prev, Bm))
    lq = loc_T[1:]
    ls = logs_T[1:]
    log_sigma = math.log(sigma)
    inv_two_var = 0.5 / (sigma * sigma)
    # KL( N(lq, exp(ls)) || N(prior, sigma) ), summed over latent dim
    kl_el = (log_sigma - ls) + (jnp.exp(2.0 * ls) + (lq - prior) ** 2) * inv_two_var - 0.5
    kl_T = jnp.sum(kl_el, axis=-1)                               # (T-1, B)

    loglik_T = -0.5 * sq_T[1:]                                   # unit-variance Gaussian loglik
    E_sum = jnp.sum(jnp.mean(loglik_T - beta * kl_T, axis=1))    # sum_t mean_b ELBO
    KL_loss = jnp.sum(jnp.mean(kl_T, axis=1))
    beta_kl = beta * KL_loss
    image_loss_sum = jnp.sum(jnp.mean(0.5 * sq_T[1:], axis=1))

    E = E_sum / T
    L = -E
    losses = {
        'camera camera0 Loss': image_loss_sum / T,
        'KL Loss': KL_loss / T,
        'Beta KL Loss': beta_kl / T,
    }
    return L, losses


# ---------------------------------------------------------------------------
# Deterministic parameter init + example run
# ---------------------------------------------------------------------------

def init_params(key, *, P, Dx, Du):
    ks = jax.random.split(key, 6)
    f32 = jnp.float32
    return {
        'w_loc': 0.01 * jax.random.normal(ks[0], (P, Dx), f32),
        'b_loc': jnp.zeros((1, Dx), f32),
        'w_scale': 0.01 * jax.random.normal(ks[1], (P, Dx), f32),
        'b_scale': jnp.full((1, Dx), -1.0, f32),
        'w_dec': 0.01 * jax.random.normal(ks[2], (Dx, P), f32),
        'b_dec': jnp.zeros((1, P), f32),
        'A': jnp.eye(Dx, dtype=f32) + 0.01 * jax.random.normal(ks[3], (Dx, Dx), f32),
        'B': 0.1 * jax.random.normal(ks[4], (Du, Dx), f32),
    }


if __name__ == "__main__":
    T, B = 8, 2
    C, H, W = 3, 16, 16
    Dx, Du = 8, 8
    P = C * H * W

    key = jax.random.PRNGKey(0)
    k_param, k_img, k_act, k_eps = jax.random.split(key, 4)

    params = init_params(k_param, P=P, Dx=Dx, Du=Du)
    batchdata = {
        'action': jax.random.normal(k_act, (T, B, Du), jnp.float32),
        'camera': {
            'camera0': jax.random.normal(k_img, (T, B, C, H, W), jnp.float32),
        },
    }
    eps = jax.random.normal(k_eps, (T, B, Dx), jnp.float32)   # deterministic rsample noise

    # Auto tiling: with N = 16 the chooser picks an 8-row tile (divides N, >= 2
    # grid steps), exercising the pipelined multi-step path without any padding.
    fwd = jax.jit(linear_dynamical_forward)
    L, losses = fwd(params, batchdata, eps)
    jax.block_until_ready((L, losses))
    print("KERNEL_OK")
</pallas_src>

<mosaic_0001>
module attributes {stable_mosaic.version = 11 : i64} {
  func.func @fused_enc_dec_kernel(%arg0: i32, %arg1: memref<8x768xf32, #tpu.memory_space<vmem>>, %arg2: memref<8x8xf32, #tpu.memory_space<vmem>>, %arg3: memref<768x16xbf16, #tpu.memory_space<vmem>>, %arg4: memref<1x16xf32, #tpu.memory_space<vmem>>, %arg5: memref<8x768xbf16, #tpu.memory_space<vmem>>, %arg6: memref<1x768xf32, #tpu.memory_space<vmem>>, %arg7: memref<8x25xf32, #tpu.memory_space<vmem>>) attributes {dimension_semantics = [#tpu.dimension_semantics<parallel>], iteration_bounds = array<i64: 2>, scalar_prefetch = 0 : i64, scratch_operands = 0 : i64, tpu.core_type = #tpu.core_type<tc>, window_params = [{transform_indices = @transform_0, window_bounds = array<i64: 8, 768>}, {transform_indices = @transform_1, window_bounds = array<i64: 8, 8>}, {pipeline_mode = #tpu.pipeline_mode<synchronous>, transform_indices = @transform_2, window_bounds = array<i64: 768, 16>}, {pipeline_mode = #tpu.pipeline_mode<synchronous>, transform_indices = @transform_3, window_bounds = array<i64: 1, 16>}, {pipeline_mode = #tpu.pipeline_mode<synchronous>, transform_indices = @transform_4, window_bounds = array<i64: 8, 768>}, {pipeline_mode = #tpu.pipeline_mode<synchronous>, transform_indices = @transform_5, window_bounds = array<i64: 1, 768>}, {transform_indices = @transform_6, window_bounds = array<i64: 8, 25>}]} {
    %c0 = arith.constant 0 : index
    %c0_0 = arith.constant 0 : index
    %0 = vector.load %arg1[%c0, %c0_0] : memref<8x768xf32, #tpu.memory_space<vmem>>, vector<8x768xf32>
    %1 = arith.truncf %0 : vector<8x768xf32> to vector<8x768xbf16>
    %c0_1 = arith.constant 0 : index
    %c0_2 = arith.constant 0 : index
    %2 = vector.load %arg3[%c0_1, %c0_2] : memref<768x16xbf16, #tpu.memory_space<vmem>>, vector<768x16xbf16>
    %cst = arith.constant dense<0.000000e+00> : vector<8x16xf32>
    %3 = tpu.matmul %1, %2, %cst {dimension_numbers = #tpu.dot_dimension_numbers<[1], [0], [0], [1], [0, 0, 1, 1], [], []>} : vector<8x768xbf16>, vector<768x16xbf16>, vector<8x16xf32> -> vector<8x16xf32>
    %c0_3 = arith.constant 0 : index
    %c0_4 = arith.constant 0 : index
    %4 = vector.load %arg4[%c0_3, %c0_4] : memref<1x16xf32, #tpu.memory_space<vmem>>, vector<1x16xf32>
    %5 = vector.broadcast %4 : vector<1x16xf32> to vector<8x16xf32>
    %6 = arith.addf %3, %5 : vector<8x16xf32>
    %7 = vector.extract_strided_slice %6 {offsets = [0, 0], sizes = [8, 8], strides = [1, 1]} : vector<8x16xf32> to vector<8x8xf32>
    %8 = vector.extract_strided_slice %6 {offsets = [0, 8], sizes = [8, 8], strides = [1, 1]} : vector<8x16xf32> to vector<8x8xf32>
    %9 = math.exp %8 : vector<8x8xf32>
    %c0_5 = arith.constant 0 : index
    %c0_6 = arith.constant 0 : index
    %10 = vector.load %arg2[%c0_5, %c0_6] : memref<8x8xf32, #tpu.memory_space<vmem>>, vector<8x8xf32>
    %11 = arith.mulf %9, %10 : vector<8x8xf32>
    %12 = arith.addf %7, %11 : vector<8x8xf32>
    %13 = arith.truncf %12 : vector<8x8xf32> to vector<8x8xbf16>
    %c0_7 = arith.constant 0 : index
    %c0_8 = arith.constant 0 : index
    %14 = vector.load %arg5[%c0_7, %c0_8] : memref<8x768xbf16, #tpu.memory_space<vmem>>, vector<8x768xbf16>
    %cst_9 = arith.constant dense<0.000000e+00> : vector<8x768xf32>
    %15 = tpu.matmul %13, %14, %cst_9 {dimension_numbers = #tpu.dot_dimension_numbers<[1], [0], [0], [1], [0, 0, 1, 1], [], []>} : vector<8x8xbf16>, vector<8x768xbf16>, vector<8x768xf32> -> vector<8x768xf32>
    %c0_10 = arith.constant 0 : index
    %c0_11 = arith.constant 0 : index
    %16 = vector.load %arg6[%c0_10, %c0_11] : memref<1x768xf32, #tpu.memory_space<vmem>>, vector<1x768xf32>
    %17 = vector.broadcast %16 : vector<1x768xf32> to vector<8x768xf32>
    %18 = arith.addf %15, %17 : vector<8x768xf32>
    %19 = arith.subf %18, %0 : vector<8x768xf32>
    %20 = arith.mulf %19, %19 : vector<8x768xf32>
    %cst_12 = arith.constant dense<0.000000e+00> : vector<8xf32>
    %21 = vector.multi_reduction <add>, %20, %cst_12 [1] : vector<8x768xf32> to vector<8xf32>
    %22 = vector.shape_cast %21 : vector<8xf32> to vector<8x1xf32>
    %23 = tpu.concatenate %6, %12, %22 in 1 : vector<8x16xf32>, vector<8x8xf32>, vector<8x1xf32> -> vector<8x25xf32>
    %c0_13 = arith.constant 0 : index
    %c0_14 = arith.constant 0 : index
    %24 = vector.load %arg7[%c0_13, %c0_14] : memref<8x25xf32, #tpu.memory_space<vmem>>, vector<8x25xf32>
    tpu.vector_store %arg7[%c0_13, %c0_14], %23 {strides = array<i32>} : memref<8x25xf32, #tpu.memory_space<vmem>>, vector<8x25xf32>,
    return
  }
  func.func @transform_0(%arg0: i32) -> (i32, i32) {
    %c0_i32 = arith.constant 0 : i32
    %c0_i32_0 = arith.constant 0 : i32
    return %arg0, %c0_i32 : i32, i32
  }
  func.func @transform_1(%arg0: i32) -> (i32, i32) {
    %c0_i32 = arith.constant 0 : i32
    %c0_i32_0 = arith.constant 0 : i32
    return %arg0, %c0_i32 : i32, i32
  }
  func.func @transform_2(%arg0: i32) -> (i32, i32) {
    %c0_i32 = arith.constant 0 : i32
    %c0_i32_0 = arith.constant 0 : i32
    %c0_i32_1 = arith.constant 0 : i32
    return %c0_i32, %c0_i32_0 : i32, i32
  }
  func.func @transform_3(%arg0: i32) -> (i32, i32) {
    %c0_i32 = arith.constant 0 : i32
    %c0_i32_0 = arith.constant 0 : i32
    %c0_i32_1 = arith.constant 0 : i32
    return %c0_i32, %c0_i32_0 : i32, i32
  }
  func.func @transform_4(%arg0: i32) -> (i32, i32) {
    %c0_i32 = arith.constant 0 : i32
    %c0_i32_0 = arith.constant 0 : i32
    %c0_i32_1 = arith.constant 0 : i32
    return %c0_i32, %c0_i32_0 : i32, i32
  }
  func.func @transform_5(%arg0: i32) -> (i32, i32) {
    %c0_i32 = arith.constant 0 : i32
    %c0_i32_0 = arith.constant 0 : i32
    %c0_i32_1 = arith.constant 0 : i32
    return %c0_i32, %c0_i32_0 : i32, i32
  }
  func.func @transform_6(%arg0: i32) -> (i32, i32) {
    %c0_i32 = arith.constant 0 : i32
    %c0_i32_0 = arith.constant 0 : i32
    return %arg0, %c0_i32 : i32, i32
  }
}

</mosaic_0001>

<llo_original>
// kernel: squeeze.1
$region0: #{squeeze.1}
  %s0 = inlined_call_operand.vmem [shape: f32[16], index: 0, kind: input, shape index: {}]
  %s1 = inlined_call_operand.vmem [shape: f32[8,2], index: 1, kind: output, shape index: {}]
  $region1: #{squeeze.1} parent=0
    #allocation0 [shape = 'u8[4096]{0}', space=vmem, size = 0x1000, scoped, tag = 'scoped mem for input reshape']
    %s3 = sshllo.u32 0, 1
    %v4 = vld [vmem:[%s0] sm:%s3]
    %5 = vst [vmem:[#allocation0] sm:%s3] %v4
    %v6 = vld [vmem:[#allocation0] sm:$0x1]
    %vm7 = vcmask 15360
    %8 = vst.msk [vmem:[%s1] sm:$0x1] %vm7, %v6
    %v9 = vld [vmem:[#allocation0] sm:$0x1]
    %10 = vrot.lane.b32.xlu0 %v9, 126
    %v11 = vpop.permute.xlu0 %10
    %vm12 = vcmask 15360
    %s13 = scalar_lea.vmem %s1, 1
    %14 = vst.msk [vmem:[%s13] sm:$0x1] %vm12, %v11
    %v15 = vld [vmem:[#allocation0] sm:$0x1]
    %16 = vrot.lane.b32.xlu0 %v15, 124
    %v17 = vpop.permute.xlu0 %16
    %vm18 = vcmask 15360
    %s19 = scalar_lea.vmem %s1, 2
    %20 = vst.msk [vmem:[%s19] sm:$0x1] %vm18, %v17
    %v21 = vld [vmem:[#allocation0] sm:$0x1]
    %22 = vrot.lane.b32.xlu0 %v21, 122
    %v23 = vpop.permute.xlu0 %22
    %vm24 = vcmask 15360
    %s25 = scalar_lea.vmem %s1, 3
    %26 = vst.msk [vmem:[%s25] sm:$0x1] %vm24, %v23
    %v27 = vld [vmem:[#allocation0] sm:$0x1]
    %28 = vrot.lane.b32.xlu0 %v27, 120
    %v29 = vpop.permute.xlu0 %28
    %vm30 = vcmask 15360
    %s31 = scalar_lea.vmem %s1, 4
    %32 = vst.msk [vmem:[%s31] sm:$0x1] %vm30, %v29
    %v33 = vld [vmem:[#allocation0] sm:$0x1]
    %34 = vrot.lane.b32.xlu0 %v33, 118
    %v35 = vpop.permute.xlu0 %34
    %vm36 = vcmask 15360
    %s37 = scalar_lea.vmem %s1, 5
    %38 = vst.msk [vmem:[%s37] sm:$0x1] %vm36, %v35
    %v39 = vld [vmem:[#allocation0] sm:$0x1]
    %40 = vrot.lane.b32.xlu0 %v39, 116
    %v41 = vpop.permute.xlu0 %40
    %vm42 = vcmask 15360
    %s43 = scalar_lea.vmem %s1, 6
    %44 = vst.msk [vmem:[%s43] sm:$0x1] %vm42, %v41
    %v45 = vld [vmem:[#allocation0] sm:$0x1]
    %46 = vrot.lane.b32.xlu0 %v45, 114
    %v47 = vpop.permute.xlu0 %46
    %vm48 = vcmask 15360
    %s49 = scalar_lea.vmem %s1, 7
    %50 = vst.msk [vmem:[%s49] sm:$0x1] %vm48, %v47

// kernel: linear_dynamical_forward.1
$region0: #{linear_dynamical_forward.1}
  #allocation0 [shape = 'u32[]', space=smem, size = 0x4, offset = 0x4, fixed_abs, tag = 'smem constant byte address 0x4 - core index']
  #allocation1 [shape = 'u32[144,128]{1,0:T(1,128)}', space=vmem, size = 0x12000, scoped, tag = 'internal scratch']
  %s0 = inlined_call_operand.vmem [shape: f32[16,768], index: 0, kind: input, shape index: {}]
  %s1 = inlined_call_operand.vmem [shape: f32[16,8], index: 1, kind: input, shape index: {}]
  %s2 = inlined_call_operand.vmem [shape: bf16[768,16], index: 2, kind: input, shape index: {}]
  %s3 = inlined_call_operand.vmem [shape: f32[1,16], index: 3, kind: input, shape index: {}]
  %s4 = inlined_call_operand.vmem [shape: bf16[8,768], index: 4, kind: input, shape index: {}]
  %s5 = inlined_call_operand.vmem [shape: f32[1,768], index: 5, kind: input, shape index: {}]
  %s6 = inlined_call_operand.vmem [shape: f32[16,25], index: 6, kind: output, shape index: {}]
  %s7 = sld [smem:[#allocation0]]
  $region57: #{linear_dynamical_forward.1} parent=0
    _
  %s9 = ssub.s32 1, %s7
  %s10 = scalar_select 0, %s9, %s7
  loop: start=0, step=1, limit=4
  $region2: #{linear_dynamical_forward.1} parent=0 // loop_pre_header
    _
  $region3: #{linear_dynamical_forward.1} parent=0 // loop_header
    %s12 = sphi 0, %s16
    %p13 = scmp.ge.s32.totalorder %s12, 4
    %s22 = sphi 0, %s24
    %s25 = sphi 0, %s22
    %s26 = sphi 0, %s25
    %s42 = sphi 0, %s26
    %s48 = sphi 0, %s50
    %s51 = sphi 0, %s48
    %s52 = sphi 0, %s51
    %s68 = sphi 0, %s52
    %s72 = sphi 0, %s72
    %s74 = sphi 0, %s72
    %s75 = sphi 0, %s74
    %s89 = sphi 0, %s75
    %s93 = sphi 0, %s93
    %s95 = sphi 0, %s93
    %s96 = sphi 0, %s95
    %s110 = sphi 0, %s96
    %s114 = sphi 0, %s114
    %s116 = sphi 0, %s114
    %s117 = sphi 0, %s116
    %s131 = sphi 0, %s117
    %s135 = sphi 0, %s135
    %s137 = sphi 0, %s135
    %s138 = sphi 0, %s137
    %s152 = sphi 0, %s138
    %s158 = sphi 0, %s160
    %s161 = sphi 0, %s158
    %s162 = sphi 0, %s161
    %s178 = sphi 0, %s162
  $region4: #{linear_dynamical_forward.1} parent=0 // loop_header_branch
    %15 = sbr.rel (%p13) target = $region8
  $region5: #{linear_dynamical_forward.1} parent=0 // loop_body
    %s17 = ssub.s32 %s12, 1
    %s18 = ssub.s32 %s12, 2
    %s19 = sadd.s32 %s12, 1
    %s20 = ssub.s32 %s12, %s19
    %p21 = scmp.eq.s32.totalorder %s20, 0
    %s23 = sadd.s32 %s22, 1
    %s24 = scalar_select %p21, %s22, %s23
    %p27 = pneg %p21
    %p28 = scmp.eq.s32.totalorder %s12, 1
    %p29 = por %p27, %p28
    %p30 = scmp.ne.s32.totalorder %s22, %s25
    %p31 = scmp.eq.s32.totalorder %s12, 0
    %p32 = por %p30, %p31
    %p33 = scmp.ne.s32.totalorder %s22, %s25
    %p34 = scmp.eq.s32.totalorder %s17, 1
    %p35 = por %p33, %p34
    %p36 = scmp.ne.s32.totalorder %s25, %s26
    %p37 = scmp.eq.s32.totalorder %s17, 0
    %p38 = por %p36, %p37
    %p39 = scmp.ne.s32.totalorder %s25, %s26
    %p40 = scmp.eq.s32.totalorder %s18, 1
    %p41 = por %p39, %p40
    %p43 = scmp.ne.s32.totalorder %s26, %s42
    %p44 = scmp.eq.s32.totalorder %s18, 0
    %p45 = por %p43, %p44
    %s46 = ssub.s32 %s12, %s19
    %p47 = scmp.eq.s32.totalorder %s46, 0
    %s49 = sadd.s32 %s48, 1
    %s50 = scalar_select %p47, %s48, %s49
    %p53 = pneg %p47
    %p54 = scmp.eq.s32.totalorder %s12, 1
    %p55 = por %p53, %p54
    %p56 = scmp.ne.s32.totalorder %s48, %s51
    %p57 = scmp.eq.s32.totalorder %s12, 0
    %p58 = por %p56, %p57
    %p59 = scmp.ne.s32.totalorder %s48, %s51
    %p60 = scmp.eq.s32.totalorder %s17, 1
    %p61 = por %p59, %p60
    %p62 = scmp.ne.s32.totalorder %s51, %s52
    %p63 = scmp.eq.s32.totalorder %s17, 0
    %p64 = por %p62, %p63
    %p65 = scmp.ne.s32.totalorder %s51, %s52
    %p66 = scmp.eq.s32.totalorder %s18, 1
    %p67 = por %p65, %p66
    %p69 = scmp.ne.s32.totalorder %s52, %s68
    %p70 = scmp.eq.s32.totalorder %s18, 0
    %p71 = por %p69, %p70
    %s73 = sadd.s32 %s72, 1
    %p76 = scmp.eq.s32.totalorder %s12, 1
    %p77 = scmp.ne.s32.totalorder %s72, %s74
    %p78 = scmp.eq.s32.totalorder %s12, 0
    %p79 = por %p77, %p78
    %p80 = scmp.ne.s32.totalorder %s72, %s74
    %p81 = scmp.eq.s32.totalorder %s17, 1
    %p82 = por %p80, %p81
    %p83 = scmp.ne.s32.totalorder %s74, %s75
    %p84 = scmp.eq.s32.totalorder %s17, 0
    %p85 = por %p83, %p84
    %p86 = scmp.ne.s32.totalorder %s74, %s75
    %p87 = scmp.eq.s32.totalorder %s18, 1
    %p88 = por %p86, %p87
    %p90 = scmp.ne.s32.totalorder %s75, %s89
    %p91 = scmp.eq.s32.totalorder %s18, 0
    %p92 = por %p90, %p91
    %s94 = sadd.s32 %s93, 1
    %p97 = scmp.eq.s32.totalorder %s12, 1
    %p98 = scmp.ne.s32.totalorder %s93, %s95
    %p99 = scmp.eq.s32.totalorder %s12, 0
    %p100 = por %p98, %p99
    %p101 = scmp.ne.s32.totalorder %s93, %s95
    %p102 = scmp.eq.s32.totalorder %s17, 1
    %p103 = por %p101, %p102
    %p104 = scmp.ne.s32.totalorder %s95, %s96
    %p105 = scmp.eq.s32.totalorder %s17, 0
    %p106 = por %p104, %p105
    %p107 = scmp.ne.s32.totalorder %s95, %s96
    %p108 = scmp.eq.s32.totalorder %s18, 1
    %p109 = por %p107, %p108
    %p111 = scmp.ne.s32.totalorder %s96, %s110
    %p112 = scmp.eq.s32.totalorder %s18, 0
    %p113 = por %p111, %p112
    %s115 = sadd.s32 %s114, 1
    %p118 = scmp.eq.s32.totalorder %s12, 1
    %p119 = scmp.ne.s32.totalorder %s114, %s116
    %p120 = scmp.eq.s32.totalorder %s12, 0
    %p121 = por %p119, %p120
    %p122 = scmp.ne.s32.totalorder %s114, %s116
    %p123 = scmp.eq.s32.totalorder %s17, 1
    %p124 = por %p122, %p123
    %p125 = scmp.ne.s32.totalorder %s116, %s117
    %p126 = scmp.eq.s32.totalorder %s17, 0
    %p127 = por %p125, %p126
    %p128 = scmp.ne.s32.totalorder %s116, %s117
    %p129 = scmp.eq.s32.totalorder %s18, 1
    %p130 = por %p128, %p129
    %p132 = scmp.ne.s32.totalorder %s117, %s131
    %p133 = scmp.eq.s32.totalorder %s18, 0
    %p134 = por %p132, %p133
    %s136 = sadd.s32 %s135, 1
    %p139 = scmp.eq.s32.totalorder %s12, 1
    %p140 = scmp.ne.s32.totalorder %s135, %s137
    %p141 = scmp.eq.s32.totalorder %s12, 0
    %p142 = por %p140, %p141
    %p143 = scmp.ne.s32.totalorder %s135, %s137
    %p144 = scmp.eq.s32.totalorder %s17, 1
    %p145 = por %p143, %p144
    %p146 = scmp.ne.s32.totalorder %s137, %s138
    %p147 = scmp.eq.s32.totalorder %s17, 0
    %p148 = por %p146, %p147
    %p149 = scmp.ne.s32.totalorder %s137, %s138
    %p150 = scmp.eq.s32.totalorder %s18, 1
    %p151 = por %p149, %p150
    %p153 = scmp.ne.s32.totalorder %s138, %s152
    %p154 = scmp.eq.s32.totalorder %s18, 0
    %p155 = por %p153, %p154
    %s156 = ssub.s32 %s12, %s19
    %p157 = scmp.eq.s32.totalorder %s156, 0
    %s159 = sadd.s32 %s158, 1
    %s160 = scalar_select %p157, %s158, %s159
    %p163 = pneg %p157
    %p164 = scmp.eq.s32.totalorder %s12, 1
    %p165 = por %p163, %p164
    %p166 = scmp.ne.s32.totalorder %s158, %s161
    %p167 = scmp.eq.s32.totalorder %s12, 0
    %p168 = por %p166, %p167
    %p169 = scmp.ne.s32.totalorder %s158, %s161
    %p170 = scmp.eq.s32.totalorder %s17, 1
    %p171 = por %p169, %p170
    %p172 = scmp.ne.s32.totalorder %s161, %s162
    %p173 = scmp.eq.s32.totalorder %s17, 0
    %p174 = por %p172, %p173
    %p175 = scmp.ne.s32.totalorder %s161, %s162
    %p176 = scmp.eq.s32.totalorder %s18, 1
    %p177 = por %p175, %p176
    %p179 = scmp.ne.s32.totalorder %s162, %s178
    %p180 = scmp.eq.s32.totalorder %s18, 0
    %p181 = por %p179, %p180
    %p182 = scmp.le.s32.totalorder 1, %s12
    %p183 = scmp.lt.s32.totalorder %s12, 3
    %p184 = pnand %p182, %p183
    %p185 = pneg %p184
    // Predicated region
    $region9: #{linear_dynamical_forward.1} parent=5 // pred_check
      _
    $region10: #{linear_dynamical_forward.1} parent=5 // pred_check_branch
      %187 = sbr.rel (%p184) target = $region12
    $region11: #{linear_dynamical_forward.1} parent=5 // pred_region
      %s188 = ssub.s32 %s12, 1
      // Predicated region
      $region13: #{linear_dynamical_forward.1} parent=11 // pred_check
        %p189 = pneg %p85
      $region14: #{linear_dynamical_forward.1} parent=11 // pred_check_branch
        %191 = sbr.rel (%p189) target = $region16
      $region15: #{linear_dynamical_forward.1} parent=11 // pred_region
        _
      $region16: #{linear_dynamical_forward.1} parent=11 // pred_fallthru
        _
      // Predicated region
      $region17: #{linear_dynamical_forward.1} parent=11 // pred_check
        %p192 = pneg %p106
      $region18: #{linear_dynamical_forward.1} parent=11 // pred_check_branch
        %194 = sbr.rel (%p192) target = $region20
      $region19: #{linear_dynamical_forward.1} parent=11 // pred_region
        _
      $region20: #{linear_dynamical_forward.1} parent=11 // pred_fallthru
        _
      // Predicated region
      $region21: #{linear_dynamical_forward.1} parent=11 // pred_check
        %p195 = pneg %p127
      $region22: #{linear_dynamical_forward.1} parent=11 // pred_check_branch
        %197 = sbr.rel (%p195) target = $region24
      $region23: #{linear_dynamical_forward.1} parent=11 // pred_region
        _
      $region24: #{linear_dynamical_forward.1} parent=11 // pred_fallthru
        _
      // Predicated region
      $region25: #{linear_dynamical_forward.1} parent=11 // pred_check
        %p198 = pneg %p148
      $region26: #{linear_dynamical_forward.1} parent=11 // pred_check_branch
        %200 = sbr.rel (%p198) target = $region28
      $region27: #{linear_dynamical_forward.1} parent=11 // pred_region
        _
      $region28: #{linear_dynamical_forward.1} parent=11 // pred_fallthru
        _
    $region12: #{linear_dynamical_forward.1} parent=5 // pred_fallthru
      _
    %p201 = scmp.lt.s32.totalorder %s12, 2
    // Predicated region
    $region29: #{linear_dynamical_forward.1} parent=5 // pred_check
      %p202 = pneg %p201
    $region30: #{linear_dynamical_forward.1} parent=5 // pred_check_branch
      %204 = sbr.rel (%p202) target = $region32
    $region31: #{linear_dynamical_forward.1} parent=5 // pred_region
      // Predicated region
      $region33: #{linear_dynamical_forward.1} parent=31 // pred_check
        %p205 = pneg %p32
      $region34: #{linear_dynamical_forward.1} parent=31 // pred_check_branch
        %207 = sbr.rel (%p205) target = $region36
      $region35: #{linear_dynamical_forward.1} parent=31 // pred_region
        %p208 = scmp.lt.s32.totalorder %s12, 1
        %s209 = scalar_select %p208, %s12, 1
        %s210 = smul.addr %s209, 6
        %s211 = smul.addr %s210, 8
        %s212 = scalar_lea.vmem %s0, %s211
      $region36: #{linear_dynamical_forward.1} parent=31 // pred_fallthru
        _
      // Predicated region
      $region37: #{linear_dynamical_forward.1} parent=31 // pred_check
        %p213 = pneg %p58
      $region38: #{linear_dynamical_forward.1} parent=31 // pred_check_branch
        %215 = sbr.rel (%p213) target = $region40
      $region39: #{linear_dynamical_forward.1} parent=31 // pred_region
        %p216 = scmp.lt.s32.totalorder %s12, 1
        %s217 = scalar_select %p216, %s12, 1
        %s218 = smul.addr %s217, 8
        %s219 = scalar_lea.vmem %s1, %s218
      $region40: #{linear_dynamical_forward.1} parent=31 // pred_fallthru
        _
    $region32: #{linear_dynamical_forward.1} parent=5 // pred_fallthru
      _
    %p220 = scmp.le.s32.totalorder 1, %s12
    %p221 = scmp.lt.s32.totalorder %s12, 3
    %p222 = pnand %p220, %p221
    %p223 = pneg %p222
    // Predicated region
    $region41: #{linear_dynamical_forward.1} parent=5 // pred_check
      _
    $region42: #{linear_dynamical_forward.1} parent=5 // pred_check_branch
      %225 = sbr.rel (%p222) target = $region44
    $region43: #{linear_dynamical_forward.1} parent=5 // pred_region
      %s226 = ssub.s32 %s12, 1
      %p227 = scmp.lt.s32.totalorder %s17, 1
      %s228 = scalar_select %p227, %s17, 1
      %s229 = smul.addr %s228, 6
      %s230 = smul.addr %s229, 8
      %s231 = scalar_lea.vmem %s0, %s230
      %p232 = pneg %p38
      %p233 = pneg %p35
      %p234 = scmp.lt.s32.totalorder %s17, 1
      %s235 = scalar_select %p234, %s17, 1
      %s236 = smul.addr %s235, 8
      %s237 = scalar_lea.vmem %s1, %s236
      %p238 = pneg %p64
      %p239 = pneg %p61
      %p240 = pneg %p85
      %p241 = pneg %p82
      %p242 = pneg %p106
      %p243 = pneg %p103
      %p244 = pneg %p127
      %p245 = pneg %p124
      %p246 = pneg %p148
      %p247 = pneg %p145
      %p248 = pneg %p174
      %p249 = pneg %p171
      %p250 = scmp.lt.s32.totalorder %s17, 1
      %s251 = scalar_select %p250, %s17, 1
      %s252 = smul.addr %s251, 8
      %s253 = scalar_lea.vmem %s6, %s252
      %p254 = scmp.lt.s32.totalorder %s17, 1
      %s255 = scalar_select %p254, %s17, 1
      %s256 = smul.addr %s255, 6
      %s257 = smul.addr %s256, 8
      %s258 = scalar_lea.vmem %s0, %s257
      %p259 = scmp.lt.s32.totalorder %s17, 1
      %s260 = scalar_select %p259, %s17, 1
      %s261 = smul.addr %s260, 8
      %s262 = scalar_lea.vmem %s1, %s261
      %p263 = scmp.lt.s32.totalorder %s17, 1
      %s264 = scalar_select %p263, %s17, 1
      %s265 = smul.addr %s264, 8
      %s266 = scalar_lea.vmem %s6, %s265
      %v268 = vld [vmem:[%s258] sm:$0xff]
      %v269 = vld [vmem:[%s258 + $0x8] sm:$0xff]
      %v270 = vld [vmem:[%s258 + $0x10] sm:$0xff]
      %v271 = vld [vmem:[%s258 + $0x18] sm:$0xff]
      %v272 = vld [vmem:[%s258 + $0x20] sm:$0xff]
      %v273 = vld [vmem:[%s258 + $0x28] sm:$0xff]
      %v274 = vpack.c.bf16 %v268, %v268
      %v275 = vpack.c.bf16 %v269, %v269
      %v276 = vpack.c.bf16 %v270, %v270
      %v277 = vpack.c.bf16 %v271, %v271
      %v278 = vpack.c.bf16 %v272, %v272
      %v279 = vpack.c.bf16 %v273, %v273
      %v280 = vld [vmem:[%s2] sm:$0xf]
      %v281 = vld [vmem:[%s2 + $0x4] sm:$0xf]
      %v282 = vld [vmem:[%s2 + $0x8] sm:$0xf]
      %v283 = vld [vmem:[%s2 + $0xc] sm:$0xf]
      %v284 = vld [vmem:[%s2 + $0x10] sm:$0xf]
      %v285 = vld [vmem:[%s2 + $0x14] sm:$0xf]
      %v286 = vld [vmem:[%s2 + $0x18] sm:$0xf]
      %v287 = vld [vmem:[%s2 + $0x1c] sm:$0xf]
      %v288 = vld [vmem:[%s2 + $0x20] sm:$0xf]
      %v289 = vld [vmem:[%s2 + $0x24] sm:$0xf]
      %v290 = vld [vmem:[%s2 + $0x28] sm:$0xf]
      %v291 = vld [vmem:[%s2 + $0x2c] sm:$0xf]
      %v292 = vld [vmem:[%s2 + $0x30] sm:$0xf]
      %v293 = vld [vmem:[%s2 + $0x34] sm:$0xf]
      %v294 = vld [vmem:[%s2 + $0x38] sm:$0xf]
      %v295 = vld [vmem:[%s2 + $0x3c] sm:$0xf]
      %v296 = vld [vmem:[%s2 + $0x40] sm:$0xf]
      %v297 = vld [vmem:[%s2 + $0x44] sm:$0xf]
      %v298 = vld [vmem:[%s2 + $0x48] sm:$0xf]
      %v299 = vld [vmem:[%s2 + $0x4c] sm:$0xf]
      %v300 = vld [vmem:[%s2 + $0x50] sm:$0xf]
      %v301 = vld [vmem:[%s2 + $0x54] sm:$0xf]
      %v302 = vld [vmem:[%s2 + $0x58] sm:$0xf]
      %v303 = vld [vmem:[%s2 + $0x5c] sm:$0xf]
      %v304 = vld [vmem:[%s2 + $0x60] sm:$0xf]
      %v305 = vld [vmem:[%s2 + $0x64] sm:$0xf]
      %v306 = vld [vmem:[%s2 + $0x68] sm:$0xf]
      %v307 = vld [vmem:[%s2 + $0x6c] sm:$0xf]
      %v308 = vld [vmem:[%s2 + $0x70] sm:$0xf]
      %v309 = vld [vmem:[%s2 + $0x74] sm:$0xf]
      %v310 = vld [vmem:[%s2 + $0x78] sm:$0xf]
      %v311 = vld [vmem:[%s2 + $0x7c] sm:$0xf]
      %v312 = vld [vmem:[%s2 + $0x80] sm:$0xf]
      %v313 = vld [vmem:[%s2 + $0x84] sm:$0xf]
      %v314 = vld [vmem:[%s2 + $0x88] sm:$0xf]
      %v315 = vld [vmem:[%s2 + $0x8c] sm:$0xf]
      %v316 = vld [vmem:[%s2 + $0x90] sm:$0xf]
      %v317 = vld [vmem:[%s2 + $0x94] sm:$0xf]
      %v318 = vld [vmem:[%s2 + $0x98] sm:$0xf]
      %v319 = vld [vmem:[%s2 + $0x9c] sm:$0xf]
      %v320 = vld [vmem:[%s2 + $0xa0] sm:$0xf]
      %v321 = vld [vmem:[%s2 + $0xa4] sm:$0xf]
      %v322 = vld [vmem:[%s2 + $0xa8] sm:$0xf]
      %v323 = vld [vmem:[%s2 + $0xac] sm:$0xf]
      %v324 = vld [vmem:[%s2 + $0xb0] sm:$0xf]
      %v325 = vld [vmem:[%s2 + $0xb4] sm:$0xf]
      %v326 = vld [vmem:[%s2 + $0xb8] sm:$0xf]
      %v327 = vld [vmem:[%s2 + $0xbc] sm:$0xf]
      %v328 = vld [vmem:[%s2 + $0xc0] sm:$0xf]
      %v329 = vld [vmem:[%s2 + $0xc4] sm:$0xf]
      %v330 = vld [vmem:[%s2 + $0xc8] sm:$0xf]
      %v331 = vld [vmem:[%s2 + $0xcc] sm:$0xf]
      %v332 = vld [vmem:[%s2 + $0xd0] sm:$0xf]
      %v333 = vld [vmem:[%s2 + $0xd4] sm:$0xf]
      %v334 = vld [vmem:[%s2 + $0xd8] sm:$0xf]
      %v335 = vld [vmem:[%s2 + $0xdc] sm:$0xf]
      %v336 = vld [vmem:[%s2 + $0xe0] sm:$0xf]
      %v337 = vld [vmem:[%s2 + $0xe4] sm:$0xf]
      %v338 = vld [vmem:[%s2 + $0xe8] sm:$0xf]
      %v339 = vld [vmem:[%s2 + $0xec] sm:$0xf]
      %v340 = vld [vmem:[%s2 + $0xf0] sm:$0xf]
      %v341 = vld [vmem:[%s2 + $0xf4] sm:$0xf]
      %v342 = vld [vmem:[%s2 + $0xf8] sm:$0xf]
      %v343 = vld [vmem:[%s2 + $0xfc] sm:$0xf]
      %v344 = vld [vmem:[%s2 + $0x100] sm:$0xf]
      %v345 = vld [vmem:[%s2 + $0x104] sm:$0xf]
      %v346 = vld [vmem:[%s2 + $0x108] sm:$0xf]
      %v347 = vld [vmem:[%s2 + $0x10c] sm:$0xf]
      %v348 = vld [vmem:[%s2 + $0x110] sm:$0xf]
      %v349 = vld [vmem:[%s2 + $0x114] sm:$0xf]
      %v350 = vld [vmem:[%s2 + $0x118] sm:$0xf]
      %v351 = vld [vmem:[%s2 + $0x11c] sm:$0xf]
      %v352 = vld [vmem:[%s2 + $0x120] sm:$0xf]
      %v353 = vld [vmem:[%s2 + $0x124] sm:$0xf]
      %v354 = vld [vmem:[%s2 + $0x128] sm:$0xf]
      %v355 = vld [vmem:[%s2 + $0x12c] sm:$0xf]
      %v356 = vld [vmem:[%s2 + $0x130] sm:$0xf]
      %v357 = vld [vmem:[%s2 + $0x134] sm:$0xf]
      %v358 = vld [vmem:[%s2 + $0x138] sm:$0xf]
      %v359 = vld [vmem:[%s2 + $0x13c] sm:$0xf]
      %v360 = vld [vmem:[%s2 + $0x140] sm:$0xf]
      %v361 = vld [vmem:[%s2 + $0x144] sm:$0xf]
      %v362 = vld [vmem:[%s2 + $0x148] sm:$0xf]
      %v363 = vld [vmem:[%s2 + $0x14c] sm:$0xf]
      %v364 = vld [vmem:[%s2 + $0x150] sm:$0xf]
      %v365 = vld [vmem:[%s2 + $0x154] sm:$0xf]
      %v366 = vld [vmem:[%s2 + $0x158] sm:$0xf]
      %v367 = vld [vmem:[%s2 + $0x15c] sm:$0xf]
      %v368 = vld [vmem:[%s2 + $0x160] sm:$0xf]
      %v369 = vld [vmem:[%s2 + $0x164] sm:$0xf]
      %v370 = vld [vmem:[%s2 + $0x168] sm:$0xf]
      %v371 = vld [vmem:[%s2 + $0x16c] sm:$0xf]
      %v372 = vld [vmem:[%s2 + $0x170] sm:$0xf]
      %v373 = vld [vmem:[%s2 + $0x174] sm:$0xf]
      %v374 = vld [vmem:[%s2 + $0x178] sm:$0xf]
      %v375 = vld [vmem:[%s2 + $0x17c] sm:$0xf]
      %v376 = vld [vmem:[%s3] sm:$0x1]
      %v378 = vlaneseq
      %v379 = vshrl.u32 %v378, 7
      %v380 = vsub.s32 0, %v379
      %v381 = vrot.slane %v376, %v380
      %v479 = vunpack.c.l.b16 %v280
      %v480 = vunpack.c.l.b16 %v281
      %v481 = vunpack.c.l.b16 %v282
      %v482 = vunpack.c.l.b16 %v283
      %v483 = vunpack.c.l.b16 %v284
      %v484 = vunpack.c.l.b16 %v285
      %v485 = vunpack.c.l.b16 %v286
      %v486 = vunpack.c.l.b16 %v287
      %v487 = vunpack.c.l.b16 %v288
      %v488 = vunpack.c.l.b16 %v289
      %v489 = vunpack.c.l.b16 %v290
      %v490 = vunpack.c.l.b16 %v291
      %v491 = vunpack.c.l.b16 %v292
      %v492 = vunpack.c.l.b16 %v293
      %v493 = vunpack.c.l.b16 %v294
      %v494 = vunpack.c.l.b16 %v295
      %v495 = vunpack.c.l.b16 %v296
      %v496 = vunpack.c.l.b16 %v297
      %v497 = vunpack.c.l.b16 %v298
      %v498 = vunpack.c.l.b16 %v299
      %v499 = vunpack.c.l.b16 %v300
      %v500 = vunpack.c.l.b16 %v301
      %v501 = vunpack.c.l.b16 %v302
      %v502 = vunpack.c.l.b16 %v303
      %v503 = vunpack.c.l.b16 %v304
      %v504 = vunpack.c.l.b16 %v305
      %v505 = vunpack.c.l.b16 %v306
      %v506 = vunpack.c.l.b16 %v307
      %v507 = vunpack.c.l.b16 %v308
      %v508 = vunpack.c.l.b16 %v309
      %v509 = vunpack.c.l.b16 %v310
      %v510 = vunpack.c.l.b16 %v311
      %v511 = vunpack.c.l.b16 %v312
      %v512 = vunpack.c.l.b16 %v313
      %v513 = vunpack.c.l.b16 %v314
      %v514 = vunpack.c.l.b16 %v315
      %v515 = vunpack.c.l.b16 %v316
      %v516 = vunpack.c.l.b16 %v317
      %v517 = vunpack.c.l.b16 %v318
      %v518 = vunpack.c.l.b16 %v319
      %v519 = vunpack.c.l.b16 %v320
      %v520 = vunpack.c.l.b16 %v321
      %v521 = vunpack.c.l.b16 %v322
      %v522 = vunpack.c.l.b16 %v323
      %v523 = vunpack.c.l.b16 %v324
      %v524 = vunpack.c.l.b16 %v325
      %v525 = vunpack.c.l.b16 %v326
      %v526 = vunpack.c.l.b16 %v327
      %v527 = vunpack.c.l.b16 %v328
      %v528 = vunpack.c.l.b16 %v329
      %v529 = vunpack.c.l.b16 %v330
      %v530 = vunpack.c.l.b16 %v331
      %v531 = vunpack.c.l.b16 %v332
      %v532 = vunpack.c.l.b16 %v333
      %v533 = vunpack.c.l.b16 %v334
      %v534 = vunpack.c.l.b16 %v335
      %v535 = vunpack.c.l.b16 %v336
      %v536 = vunpack.c.l.b16 %v337
      %v537 = vunpack.c.l.b16 %v338
      %v538 = vunpack.c.l.b16 %v339
      %v539 = vunpack.c.l.b16 %v340
      %v540 = vunpack.c.l.b16 %v341
      %v541 = vunpack.c.l.b16 %v342
      %v542 = vunpack.c.l.b16 %v343
      %v543 = vunpack.c.l.b16 %v344
      %v544 = vunpack.c.l.b16 %v345
      %v545 = vunpack.c.l.b16 %v346
      %v546 = vunpack.c.l.b16 %v347
      %v547 = vunpack.c.l.b16 %v348
      %v548 = vunpack.c.l.b16 %v349
      %v549 = vunpack.c.l.b16 %v350
      %v550 = vunpack.c.l.b16 %v351
      %v551 = vunpack.c.l.b16 %v352
      %v552 = vunpack.c.l.b16 %v353
      %v553 = vunpack.c.l.b16 %v354
      %v554 = vunpack.c.l.b16 %v355
      %v555 = vunpack.c.l.b16 %v356
      %v556 = vunpack.c.l.b16 %v357
      %v557 = vunpack.c.l.b16 %v358
      %v558 = vunpack.c.l.b16 %v359
      %v559 = vunpack.c.l.b16 %v360
      %v560 = vunpack.c.l.b16 %v361
      %v561 = vunpack.c.l.b16 %v362
      %v562 = vunpack.c.l.b16 %v363
      %v563 = vunpack.c.l.b16 %v364
      %v564 = vunpack.c.l.b16 %v365
      %v565 = vunpack.c.l.b16 %v366
      %v566 = vunpack.c.l.b16 %v367
      %v567 = vunpack.c.l.b16 %v368
      %v568 = vunpack.c.l.b16 %v369
      %v569 = vunpack.c.l.b16 %v370
      %v570 = vunpack.c.l.b16 %v371
      %v571 = vunpack.c.l.b16 %v372
      %v572 = vunpack.c.l.b16 %v373
      %v573 = vunpack.c.l.b16 %v374
      %v574 = vunpack.c.l.b16 %v375
      %v575 = vpack.c.b16 %v480, %v479
      %v576 = vpack.c.b16 %v482, %v481
      %v577 = vpack.c.b16 %v484, %v483
      %v578 = vpack.c.b16 %v486, %v485
      %v579 = vpack.c.b16 %v488, %v487
      %v580 = vpack.c.b16 %v490, %v489
      %v581 = vpack.c.b16 %v492, %v491
      %v582 = vpack.c.b16 %v494, %v493
      %v583 = vpack.c.b16 %v496, %v495
      %v584 = vpack.c.b16 %v498, %v497
      %v585 = vpack.c.b16 %v500, %v499
      %v586 = vpack.c.b16 %v502, %v501
      %v587 = vpack.c.b16 %v504, %v503
      %v588 = vpack.c.b16 %v506, %v505
      %v589 = vpack.c.b16 %v508, %v507
      %v590 = vpack.c.b16 %v510, %v509
      %v591 = vpack.c.b16 %v512, %v511
      %v592 = vpack.c.b16 %v514, %v513
      %v593 = vpack.c.b16 %v516, %v515
      %v594 = vpack.c.b16 %v518, %v517
      %v595 = vpack.c.b16 %v520, %v519
      %v596 = vpack.c.b16 %v522, %v521
      %v597 = vpack.c.b16 %v524, %v523
      %v598 = vpack.c.b16 %v526, %v525
      %v599 = vpack.c.b16 %v528, %v527
      %v600 = vpack.c.b16 %v530, %v529
      %v601 = vpack.c.b16 %v532, %v531
      %v602 = vpack.c.b16 %v534, %v533
      %v603 = vpack.c.b16 %v536, %v535
      %v604 = vpack.c.b16 %v538, %v537
      %v605 = vpack.c.b16 %v540, %v539
      %v606 = vpack.c.b16 %v542, %v541
      %v607 = vpack.c.b16 %v544, %v543
      %v608 = vpack.c.b16 %v546, %v545
      %v609 = vpack.c.b16 %v548, %v547
      %v610 = vpack.c.b16 %v550, %v549
      %v611 = vpack.c.b16 %v552, %v551
      %v612 = vpack.c.b16 %v554, %v553
      %v613 = vpack.c.b16 %v556, %v555
      %v614 = vpack.c.b16 %v558, %v557
      %v615 = vpack.c.b16 %v560, %v559
      %v616 = vpack.c.b16 %v562, %v561
      %v617 = vpack.c.b16 %v564, %v563
      %v618 = vpack.c.b16 %v566, %v565
      %v619 = vpack.c.b16 %v568, %v567
      %v620 = vpack.c.b16 %v570, %v569
      %v621 = vpack.c.b16 %v572, %v571
      %v622 = vpack.c.b16 %v574, %v573
      %671 = vmatprep.subr.bf16.mxu0 0
      %672 = vmatpush1.bf16.msra.mxu0 %v575
      %673 = vmatprep.subr.bf16.mxu0 0
      %674 = vmatpush1.bf16.msra.mxu0 %v576
      %675 = vmatprep.subr.bf16.mxu0 0
      %676 = vmatpush1.bf16.msra.mxu0 %v577
      %677 = vmatprep.subr.bf16.mxu0 0
      %678 = vmatpush1.bf16.msra.mxu0 %v578
      %679 = vmatprep.subr.bf16.mxu0 0
      %680 = vmatpush1.bf16.msra.mxu0 %v579
      %681 = vmatprep.subr.bf16.mxu0 0
      %682 = vmatpush1.bf16.msra.mxu0 %v580
      %683 = vmatprep.subr.bf16.mxu0 0
      %684 = vmatpush1.bf16.msra.mxu0 %v581
      %685 = vmatprep.subr.bf16.mxu0 0
      %686 = vmatpush1.bf16.msra.mxu0 %v582
      %687 = vmatprep.subr.bf16.mxu0 0
      %688 = vmatpush1.bf16.msra.mxu0 %v583
      %689 = vmatprep.subr.bf16.mxu0 0
      %690 = vmatpush1.bf16.msra.mxu0 %v584
      %691 = vmatprep.subr.bf16.mxu0 0
      %692 = vmatpush1.bf16.msra.mxu0 %v585
      %693 = vmatprep.subr.bf16.mxu0 0
      %694 = vmatpush1.bf16.msra.mxu0 %v586
      %695 = vmatprep.subr.bf16.mxu0 0
      %696 = vmatpush1.bf16.msra.mxu0 %v587
      %697 = vmatprep.subr.bf16.mxu0 0
      %698 = vmatpush1.bf16.msra.mxu0 %v588
      %699 = vmatprep.subr.bf16.mxu0 0
      %700 = vmatpush1.bf16.msra.mxu0 %v589
      %701 = vmatprep.subr.bf16.mxu0 0
      %702 = vmatpush1.bf16.msra.mxu0 %v590
      %703 = vmatprep.mubr.bf16.mxu0 %v275
      %704 = vmatmul.mubr.bf16.gmra.mrb[0].mxu0 %v274
      %v705 = vpop.f32.mrb[0].mxu0
      %v706 = vadd.f32 %v381, %v705
      %v707 = vpop.f32.mrb[0].mxu0
      %v708 = vpop.f32.mrb[0].mxu0
      %v709 = vpop.f32.mrb[0].mxu0
      %710 = vdwg.mxu0
      %711 = vmatprep.subr.bf16.mxu0 0
      %712 = vmatpush1.bf16.msra.mxu0 %v591
      %713 = vmatprep.subr.bf16.mxu0 0
      %714 = vmatpush1.bf16.msra.mxu0 %v592
      %715 = vmatprep.subr.bf16.mxu0 0
      %716 = vmatpush1.bf16.msra.mxu0 %v593
      %717 = vmatprep.subr.bf16.mxu0 0
      %718 = vmatpush1.bf16.msra.mxu0 %v594
      %719 = vmatprep.subr.bf16.mxu0 0
      %720 = vmatpush1.bf16.msra.mxu0 %v595
      %721 = vmatprep.subr.bf16.mxu0 0
      %722 = vmatpush1.bf16.msra.mxu0 %v596
      %723 = vmatprep.subr.bf16.mxu0 0
      %724 = vmatpush1.bf16.msra.mxu0 %v597
      %725 = vmatprep.subr.bf16.mxu0 0
      %726 = vmatpush1.bf16.msra.mxu0 %v598
      %727 = vmatprep.subr.bf16.mxu0 0
      %728 = vmatpush1.bf16.msra.mxu0 %v599
      %729 = vmatprep.subr.bf16.mxu0 0
      %730 = vmatpush1.bf16.msra.mxu0 %v600
      %731 = vmatprep.subr.bf16.mxu0 0
      %732 = vmatpush1.bf16.msra.mxu0 %v601
      %733 = vmatprep.subr.bf16.mxu0 0
      %734 = vmatpush1.bf16.msra.mxu0 %v602
      %735 = vmatprep.subr.bf16.mxu0 0
      %736 = vmatpush1.bf16.msra.mxu0 %v603
      %737 = vmatprep.subr.bf16.mxu0 0
      %738 = vmatpush1.bf16.msra.mxu0 %v604
      %739 = vmatprep.subr.bf16.mxu0 0
      %740 = vmatpush1.bf16.msra.mxu0 %v605
      %741 = vmatprep.subr.bf16.mxu0 0
      %742 = vmatpush1.bf16.msra.mxu0 %v606
      %743 = vmatprep.mubr.bf16.mxu0 %v277
      %744 = vmatmul.mubr.bf16.gmra.mrb[0].mxu0 %v276
      %v745 = vpop.f32.mrb[0].mxu0
      %v746 = vadd.f32 %v706, %v745
      %v747 = vpop.f32.mrb[0].mxu0
      %v748 = vpop.f32.mrb[0].mxu0
      %v749 = vpop.f32.mrb[0].mxu0
      %750 = vdwg.mxu0
      %751 = vmatprep.subr.bf16.mxu0 0
      %752 = vmatpush1.bf16.msra.mxu0 %v607
      %753 = vmatprep.subr.bf16.mxu0 0
      %754 = vmatpush1.bf16.msra.mxu0 %v608
      %755 = vmatprep.subr.bf16.mxu0 0
      %756 = vmatpush1.bf16.msra.mxu0 %v609
      %757 = vmatprep.subr.bf16.mxu0 0
      %758 = vmatpush1.bf16.msra.mxu0 %v610
      %759 = vmatprep.subr.bf16.mxu0 0
      %760 = vmatpush1.bf16.msra.mxu0 %v611
      %761 = vmatprep.subr.bf16.mxu0 0
      %762 = vmatpush1.bf16.msra.mxu0 %v612
      %763 = vmatprep.subr.bf16.mxu0 0
      %764 = vmatpush1.bf16.msra.mxu0 %v613
      %765 = vmatprep.subr.bf16.mxu0 0
      %766 = vmatpush1.bf16.msra.mxu0 %v614
      %767 = vmatprep.subr.bf16.mxu0 0
      %768 = vmatpush1.bf16.msra.mxu0 %v615
      %769 = vmatprep.subr.bf16.mxu0 0
      %770 = vmatpush1.bf16.msra.mxu0 %v616
      %771 = vmatprep.subr.bf16.mxu0 0
      %772 = vmatpush1.bf16.msra.mxu0 %v617
      %773 = vmatprep.subr.bf16.mxu0 0
      %774 = vmatpush1.bf16.msra.mxu0 %v618
      %775 = vmatprep.subr.bf16.mxu0 0
      %776 = vmatpush1.bf16.msra.mxu0 %v619
      %777 = vmatprep.subr.bf16.mxu0 0
      %778 = vmatpush1.bf16.msra.mxu0 %v620
      %779 = vmatprep.subr.bf16.mxu0 0
      %780 = vmatpush1.bf16.msra.mxu0 %v621
      %781 = vmatprep.subr.bf16.mxu0 0
      %782 = vmatpush1.bf16.msra.mxu0 %v622
      %783 = vmatprep.mubr.bf16.mxu0 %v279
      %784 = vmatmul.mubr.bf16.gmra.mrb[0].mxu0 %v278
      %v785 = vpop.f32.mrb[0].mxu0
      %v786 = vadd.f32 %v746, %v785
      %v787 = vpop.f32.mrb[0].mxu0
      %v788 = vpop.f32.mrb[0].mxu0
      %v789 = vpop.f32.mrb[0].mxu0
      %790 = vdwg.mxu0
      %v791 = vmul.f32 %v786, 1.442695
      %v792 = vpow.pop %v791
      %v793 = vld [vmem:[%s262] sm:$0xff]
      %795 = vrot.lane.b32.xlu0 %v793, 8
      %v796 = vpop.permute.xlu0 %795
      %v798 = vmul.f32 %v792, %v796
      %800 = vrot.lane.b32.xlu0 %v798, 120
      %v801 = vpop.permute.xlu0 %800
      %v803 = vadd.f32 %v786, %v801
      %v804 = vpack.c.bf16 %v803, %v803
      %v805 = vld [vmem:[%s4] sm:$0xff]
      %v806 = vld [vmem:[%s4 + $0x8] sm:$0xff]
      %v807 = vld [vmem:[%s4 + $0x10] sm:$0xff]
      %v808 = vld [vmem:[%s5] sm:$0x3f]
      %v810 = vlaneseq
      %v811 = vshrl.u32 %v810, 7
      %v812 = vsub.s32 0, %v811
      %v813 = vrot.slane %v808, %v812
      %v814 = vlaneseq
      %v815 = vshrl.u32 %v814, 7
      %v816 = vsub.s32 1, %v815
      %v817 = vrot.slane %v808, %v816
      %v818 = vlaneseq
      %v819 = vshrl.u32 %v818, 7
      %v820 = vsub.s32 2, %v819
      %v821 = vrot.slane %v808, %v820
      %v822 = vlaneseq
      %v823 = vshrl.u32 %v822, 7
      %v824 = vsub.s32 3, %v823
      %v825 = vrot.slane %v808, %v824
      %v826 = vlaneseq
      %v827 = vshrl.u32 %v826, 7
      %v828 = vsub.s32 4, %v827
      %v829 = vrot.slane %v808, %v828
      %v830 = vlaneseq
      %v831 = vshrl.u32 %v830, 7
      %v832 = vsub.s32 5, %v831
      %v833 = vrot.slane %v808, %v832
      %v843 = vunpack.c.l.b16 %v805
      %v844 = vunpack.c.h.b16 %v805
      %v845 = vunpack.c.l.b16 %v806
      %v846 = vunpack.c.h.b16 %v806
      %v847 = vunpack.c.l.b16 %v807
      %v848 = vunpack.c.h.b16 %v807
      %v849 = vpack.c.b16 %v843, %v843
      %v850 = vpack.c.b16 %v844, %v844
      %v851 = vpack.c.b16 %v845, %v845
      %v852 = vpack.c.b16 %v846, %v846
      %v853 = vpack.c.b16 %v847, %v847
      %v854 = vpack.c.b16 %v848, %v848
      %vm855 = vcmask 64512
      %v857 = vsel %vm855, %v804, 0
      %vm859 = vcmask 1043456
      %v861 = vsel %vm859, %v849, 0
      %v864 = vsel %vm859, %v850, 0
      %v867 = vsel %vm859, %v851, 0
      %v870 = vsel %vm859, %v852, 0
      %v873 = vsel %vm859, %v853, 0
      %v876 = vsel %vm859, %v854, 0
      %878 = vmatprep.subr.bf16.mxu0 %v864
      %879 = vmatpush1.bf16.msra.mxu0 %v861
      %880 = vmatprep.subr.bf16.mxu0 0
      %881 = vmatpush1.bf16.msra.mxu0 0
      %882 = vmatprep.subr.bf16.mxu0 0
      %883 = vmatpush1.bf16.msra.mxu0 0
      %884 = vmatprep.subr.bf16.mxu0 0
      %885 = vmatpush1.bf16.msra.mxu0 0
      %886 = vmatprep.subr.bf16.mxu0 0
      %887 = vmatpush1.bf16.msra.mxu0 0
      %888 = vmatprep.subr.bf16.mxu0 0
      %889 = vmatpush1.bf16.msra.mxu0 0
      %890 = vmatprep.subr.bf16.mxu0 0
      %891 = vmatpush1.bf16.msra.mxu0 0
      %892 = vmatprep.subr.bf16.mxu0 0
      %893 = vmatpush1.bf16.msra.mxu0 0
      %894 = vmatprep.subr.bf16.mxu0 0
      %895 = vmatpush1.bf16.msra.mxu0 0
      %896 = vmatprep.subr.bf16.mxu0 0
      %897 = vmatpush1.bf16.msra.mxu0 0
      %898 = vmatprep.subr.bf16.mxu0 0
      %899 = vmatpush1.bf16.msra.mxu0 0
      %900 = vmatprep.subr.bf16.mxu0 0
      %901 = vmatpush1.bf16.msra.mxu0 0
      %902 = vmatprep.subr.bf16.mxu0 0
      %903 = vmatpush1.bf16.msra.mxu0 0
      %904 = vmatprep.subr.bf16.mxu0 0
      %905 = vmatpush1.bf16.msra.mxu0 0
      %906 = vmatprep.subr.bf16.mxu0 0
      %907 = vmatpush1.bf16.msra.mxu0 0
      %908 = vmatprep.subr.bf16.mxu0 0
      %909 = vmatpush1.bf16.msra.mxu0 0
      %910 = vmatprep.mubr.bf16.mxu0 0
      %911 = vmatmul.mubr.bf16.gmra.mrb[0].mxu0 %v857
      %v912 = vpop.f32.mrb[0].mxu0
      %v913 = vadd.f32 %v813, %v912
      %v914 = vpop.f32.mrb[0].mxu0
      %v915 = vadd.f32 %v817, %v914
      %v916 = vpop.f32.mrb[0].mxu0
      %v917 = vpop.f32.mrb[0].mxu0
      %918 = vdwg.mxu0
      %919 = vmatprep.subr.bf16.mxu0 %v870
      %920 = vmatpush1.bf16.msra.mxu0 %v867
      %921 = vmatprep.subr.bf16.mxu0 0
      %922 = vmatpush1.bf16.msra.mxu0 0
      %923 = vmatprep.subr.bf16.mxu0 0
      %924 = vmatpush1.bf16.msra.mxu0 0
      %925 = vmatprep.subr.bf16.mxu0 0
      %926 = vmatpush1.bf16.msra.mxu0 0
      %927 = vmatprep.subr.bf16.mxu0 0
      %928 = vmatpush1.bf16.msra.mxu0 0
      %929 = vmatprep.subr.bf16.mxu0 0
      %930 = vmatpush1.bf16.msra.mxu0 0
      %931 = vmatprep.subr.bf16.mxu0 0
      %932 = vmatpush1.bf16.msra.mxu0 0
      %933 = vmatprep.subr.bf16.mxu0 0
      %934 = vmatpush1.bf16.msra.mxu0 0
      %935 = vmatprep.subr.bf16.mxu0 0
      %936 = vmatpush1.bf16.msra.mxu0 0
      %937 = vmatprep.subr.bf16.mxu0 0
      %938 = vmatpush1.bf16.msra.mxu0 0
      %939 = vmatprep.subr.bf16.mxu0 0
      %940 = vmatpush1.bf16.msra.mxu0 0
      %941 = vmatprep.subr.bf16.mxu0 0
      %942 = vmatpush1.bf16.msra.mxu0 0
      %943 = vmatprep.subr.bf16.mxu0 0
      %944 = vmatpush1.bf16.msra.mxu0 0
      %945 = vmatprep.subr.bf16.mxu0 0
      %946 = vmatpush1.bf16.msra.mxu0 0
      %947 = vmatprep.subr.bf16.mxu0 0
      %948 = vmatpush1.bf16.msra.mxu0 0
      %949 = vmatprep.subr.bf16.mxu0 0
      %950 = vmatpush1.bf16.msra.mxu0 0
      %951 = vmatprep.mubr.bf16.mxu0 0
      %952 = vmatmul.mubr.bf16.gmra.mrb[0].mxu0 %v857
      %v953 = vpop.f32.mrb[0].mxu0
      %v954 = vadd.f32 %v821, %v953
      %v955 = vpop.f32.mrb[0].mxu0
      %v956 = vadd.f32 %v825, %v955
      %v957 = vpop.f32.mrb[0].mxu0
      %v958 = vpop.f32.mrb[0].mxu0
      %959 = vdwg.mxu0
      %960 = vmatprep.subr.bf16.mxu0 %v876
      %961 = vmatpush1.bf16.msra.mxu0 %v873
      %962 = vmatprep.subr.bf16.mxu0 0
      %963 = vmatpush1.bf16.msra.mxu0 0
      %964 = vmatprep.subr.bf16.mxu0 0
      %965 = vmatpush1.bf16.msra.mxu0 0
      %966 = vmatprep.subr.bf16.mxu0 0
      %967 = vmatpush1.bf16.msra.mxu0 0
      %968 = vmatprep.subr.bf16.mxu0 0
      %969 = vmatpush1.bf16.msra.mxu0 0
      %970 = vmatprep.subr.bf16.mxu0 0
      %971 = vmatpush1.bf16.msra.mxu0 0
      %972 = vmatprep.subr.bf16.mxu0 0
      %973 = vmatpush1.bf16.msra.mxu0 0
      %974 = vmatprep.subr.bf16.mxu0 0
      %975 = vmatpush1.bf16.msra.mxu0 0
      %976 = vmatprep.subr.bf16.mxu0 0
      %977 = vmatpush1.bf16.msra.mxu0 0
      %978 = vmatprep.subr.bf16.mxu0 0
      %979 = vmatpush1.bf16.msra.mxu0 0
      %980 = vmatprep.subr.bf16.mxu0 0
      %981 = vmatpush1.bf16.msra.mxu0 0
      %982 = vmatprep.subr.bf16.mxu0 0
      %983 = vmatpush1.bf16.msra.mxu0 0
      %984 = vmatprep.subr.bf16.mxu0 0
      %985 = vmatpush1.bf16.msra.mxu0 0
      %986 = vmatprep.subr.bf16.mxu0 0
      %987 = vmatpush1.bf16.msra.mxu0 0
      %988 = vmatprep.subr.bf16.mxu0 0
      %989 = vmatpush1.bf16.msra.mxu0 0
      %990 = vmatprep.subr.bf16.mxu0 0
      %991 = vmatpush1.bf16.msra.mxu0 0
      %992 = vmatprep.mubr.bf16.mxu0 0
      %993 = vmatmul.mubr.bf16.gmra.mrb[0].mxu0 %v857
      %v994 = vpop.f32.mrb[0].mxu0
      %v995 = vadd.f32 %v829, %v994
      %v996 = vpop.f32.mrb[0].mxu0
      %v997 = vadd.f32 %v833, %v996
      %v998 = vpop.f32.mrb[0].mxu0
      %v999 = vpop.f32.mrb[0].mxu0
      %1000 = vdwg.mxu0
      %v1001 = vsub.f32 %v913, %v268
      %v1002 = vsub.f32 %v915, %v269
      %v1003 = vsub.f32 %v954, %v270
      %v1004 = vsub.f32 %v956, %v271
      %v1005 = vsub.f32 %v995, %v272
      %v1006 = vsub.f32 %v997, %v273
      %v1007 = vmul.f32 %v1001, %v1001
      %v1008 = vmul.f32 %v1002, %v1002
      %v1009 = vmul.f32 %v1003, %v1003
      %v1010 = vmul.f32 %v1004, %v1004
      %v1011 = vmul.f32 %v1005, %v1005
      %v1012 = vmul.f32 %v1006, %v1006
      %v1013 = vadd.f32 %v1007, %v1008
      %v1014 = vadd.f32 %v1013, %v1009
      %v1015 = vadd.f32 %v1014, %v1010
      %v1016 = vadd.f32 %v1015, %v1011
      %v1017 = vadd.f32 %v1016, %v1012
      %1018 = vadd.xlane.f32.xlu0 %v1017
      %v1019 = vpop.xlane.xlu0 %1018
      %1021 = vrot.lane.b32.xlu0 %v803, 16
      %v1022 = vpop.permute.xlu0 %1021
      %vm1024 = vcmask 130048
      %v1025 = vsel %vm1024, %v786, %v1022
      %vm1026 = vcmask 195584
      %v1027 = vsel %vm1026, %v1025, %v1019
      %vm1028 = vcmask 203776
      %1029 = vst.msk [vmem:[%s266] sm:$0xff] %vm1028, %v1027
      %p1030 = scmp.lt.s32.totalorder %s17, 1
      %s1031 = scalar_select %p1030, %s17, 1
      %s1032 = smul.addr %s1031, 8
      %s1033 = scalar_lea.vmem %s6, %s1032
      // Predicated region
      $region45: #{linear_dynamical_forward.1} parent=43 // pred_check
        %p1034 = pneg %p171
      $region46: #{linear_dynamical_forward.1} parent=43 // pred_check_branch
        %1036 = sbr.rel (%p1034) target = $region48
      $region47: #{linear_dynamical_forward.1} parent=43 // pred_region
        _
      $region48: #{linear_dynamical_forward.1} parent=43 // pred_fallthru
        _
    $region44: #{linear_dynamical_forward.1} parent=5 // pred_fallthru
      _
    %p1037 = scmp.le.s32.totalorder 2, %s12
    // Predicated region
    $region49: #{linear_dynamical_forward.1} parent=5 // pred_check
      %p1038 = pneg %p1037
    $region50: #{linear_dynamical_forward.1} parent=5 // pred_check_branch
      %1040 = sbr.rel (%p1038) target = $region52
    $region51: #{linear_dynamical_forward.1} parent=5 // pred_region
      %s1041 = ssub.s32 %s12, 2
      // Predicated region
      $region53: #{linear_dynamical_forward.1} parent=51 // pred_check
        %p1042 = pneg %p177
      $region54: #{linear_dynamical_forward.1} parent=51 // pred_check_branch
        %1044 = sbr.rel (%p1042) target = $region56
      $region55: #{linear_dynamical_forward.1} parent=51 // pred_region
        %p1045 = scmp.lt.s32.totalorder %s18, 1
        %s1046 = scalar_select %p1045, %s18, 1
        %s1047 = smul.addr %s1046, 8
        %s1048 = scalar_lea.vmem %s6, %s1047
      $region56: #{linear_dynamical_forward.1} parent=51 // pred_fallthru
        _
    $region52: #{linear_dynamical_forward.1} parent=5 // pred_fallthru
      _
  $region6: #{linear_dynamical_forward.1} parent=0 // loop_footer
    %s16 = sadd.s32 1, %s12
  $region7: #{linear_dynamical_forward.1} parent=0 // loop_footer_branch
    %11 = sbr.rel target = $region3
  $region8: #{linear_dynamical_forward.1} parent=0 // loop_exit
    _

</llo_original>
